<compile_context>
chip_gen: v6e
topology: v6e:2x2x1
jax: 0.10.0
libtpu: 0.0.40
codegen_flags: <defaults>
</compile_context>

<pallas_src>
import functools

import jax
import jax.numpy as jnp
import numpy as np
from jax.experimental import pallas as pl
from jax.experimental.pallas import tpu as pltpu


# ----------------------------------------------------------------------------
# Kernel 1: per-channel-tile DropBlock keep-mask + partial mask sums.
# ----------------------------------------------------------------------------
def _dropblock_mask_kernel(noise_ref, valid_ref, band_ref, band_t_ref,
                           mask_ref, psum_ref, *, block_size, gamma, width):
    """noise_ref : (C_TILE, H, W) f32 uniform noise
       valid_ref : (H, W)         f32 valid-block-center mask       (resident)
       band_ref  : (C_TILE, H, H) bf16 banded row-window matrix      (resident)
       band_t_ref: (C_TILE, W, W) bf16 banded col-window matrix      (resident)
       mask_ref  : (C_TILE, H, W) bf16 keep mask (1 keep / 0 drop)
       psum_ref  : (1, 1, 1)      f32 partial sum of the keep mask
    """
    noise = noise_ref[...]                      # (C, H, W) f32
    valid = valid_ref[...]                      # (H, W)    f32

    # torch: block_pattern = (1 - valid + (1 - gamma) + rand >= 1)
    #   <=>  pattern == 0  iff  valid and rand < gamma   (a "drop seed")
    seed = jnp.where(noise < gamma, 1.0, 0.0) * valid[None, :, :]   # f32 0/1

    if block_size == width:
        # torch path: min over the whole spatial plane, broadcast back.
        any_drop = jnp.sum(seed, axis=(1, 2), keepdims=True)        # (C, 1, 1)
        mask = jnp.broadcast_to(jnp.where(any_drop > 0.5, 0.0, 1.0), seed.shape)
    else:
        # Stride-1 min-pool with implicit padding == "window count of drop
        # seeds is zero".  Separable box filter as two batched MXU matmuls;
        # all values are small non-negative integers -> exact in bf16/f32.
        seed_bf = seed.astype(jnp.bfloat16)
        # column pass: t[c,h,j] = sum_w seed[c,h,w] * band_t[w,j]
        t = jnp.einsum('chw,cwj->chj', seed_bf, band_t_ref[...],
                       preferred_element_type=jnp.float32)
        # row pass:    counts[c,i,j] = sum_h band[i,h] * t[c,h,j]
        counts = jnp.einsum('cih,chj->cij', band_ref[...],
                            t.astype(jnp.bfloat16),
                            preferred_element_type=jnp.float32)
        mask = jnp.where(counts < 0.5, 1.0, 0.0)                    # f32 0/1

    mask_ref[...] = mask.astype(mask_ref.dtype)
    psum_ref[...] = jnp.sum(mask, axis=(0, 1, 2), keepdims=True)


# ----------------------------------------------------------------------------
# Kernel 2: out = x * mask * scale   (scale = numel / sum(mask), from SMEM)
# ----------------------------------------------------------------------------
def _dropblock_apply_kernel(x_ref, mask_ref, scale_ref, out_ref):
    scale = scale_ref[0, 0]                     # scalar from SMEM
    out_ref[...] = (x_ref[...].astype(jnp.float32)
                    * mask_ref[...].astype(jnp.float32)
                    * scale).astype(out_ref.dtype)


# ----------------------------------------------------------------------------
# Tiling helpers
# ----------------------------------------------------------------------------
def _pick_channel_tile(nchan, plane_bytes, target_bytes=2 << 20):
    """Largest divisor of nchan whose block is <= ~target_bytes."""
    ct = max(1, min(nchan, target_bytes // max(plane_bytes, 1)))
    while nchan % ct != 0:
        ct -= 1
    return ct


def _pick_lane_width(total_elems):
    """Large multiple-of-128 lane width for the flat elementwise pass."""
    for lanes in (1024, 512, 256, 128):
        if total_elems % lanes == 0:
            return lanes
    return None


def _pick_row_block(rows, row_bytes, target_bytes=2 << 20):
    """Row-block (multiple of 8 or full extent) giving ~target_bytes blocks."""
    target_rows = max(8, target_bytes // max(row_bytes, 1))
    if rows <= target_rows:
        return rows
    rb = (min(rows, target_rows) // 8) * 8
    while rb >= 8 and rows % rb != 0:
        rb -= 8
    return rb if rb >= 8 else rows


# ----------------------------------------------------------------------------
# Wrapper (glue: shape plumbing, scalar prob math, early-exit branches)
# ----------------------------------------------------------------------------
def dropblock_forward(x, noise, *, block_size=7, keep_prob=0.9,
                      current_step=0.0, train_steps=1.0, training=True):
    current_ratio = current_step / train_steps
    _keep_prob = 1.0 - current_ratio * (1.0 - keep_prob)
    if (not training) or _keep_prob == 1.0:
        return x

    nb, nc, height, width = x.shape
    if height != width:
        raise ValueError('Input tensor with width != height is not supported.')

    bs = min(block_size, width)
    gamma = (1.0 - _keep_prob) * width ** 2 / bs ** 2 / (width - bs + 1) ** 2

    nchan = nb * nc
    total_elems = nchan * height * width
    noise_f = noise.reshape(nchan, height, width).astype(jnp.float32)

    # ---- static operands (host-built once, resident in VMEM) ---------------
    lo = bs // 2
    rr = np.arange(height)[:, None]
    cc = np.arange(width)[None, :]
    valid_np = ((rr >= lo) & (rr < height - (bs - 1) // 2) &
                (cc >= lo) & (cc < width - (bs - 1) // 2)).astype(np.float32)

    sdim = height                       # == width (square enforced above)
    ar = np.arange(sdim)
    # band[o, k] = 1  iff  input index k lies in the window of output index o
    band_np = ((ar[None, :] >= ar[:, None] - lo) &
               (ar[None, :] <= ar[:, None] - lo + bs - 1)).astype(np.float32)

    plane_bytes = height * width * 4
    c_tile = _pick_channel_tile(nchan, plane_bytes)
    num_tiles = nchan // c_tile

    band_b = jnp.asarray(np.ascontiguousarray(
        np.broadcast_to(band_np, (c_tile, sdim, sdim))), dtype=jnp.bfloat16)
    band_tb = jnp.asarray(np.ascontiguousarray(
        np.broadcast_to(band_np.T, (c_tile, sdim, sdim))), dtype=jnp.bfloat16)
    valid_j = jnp.asarray(valid_np)

    # ---- kernel 1: keep mask (bf16) + per-tile partial sums -----------------
    mask, psum = pl.pallas_call(
        functools.partial(_dropblock_mask_kernel, block_size=bs,
                          gamma=float(gamma), width=width),
        out_shape=(jax.ShapeDtypeStruct((nchan, height, width), jnp.bfloat16),
                   jax.ShapeDtypeStruct((num_tiles, 1, 1), jnp.float32)),
        grid=(num_tiles,),
        in_specs=[pl.BlockSpec((c_tile, height, width), lambda i: (i, 0, 0)),
                  pl.BlockSpec((height, width), lambda i: (0, 0)),
                  pl.BlockSpec((c_tile, sdim, sdim), lambda i: (0, 0, 0)),
                  pl.BlockSpec((c_tile, sdim, sdim), lambda i: (0, 0, 0))],
        out_specs=(pl.BlockSpec((c_tile, height, width), lambda i: (i, 0, 0)),
                   pl.BlockSpec((1, 1, 1), lambda i: (i, 0, 0))),
        compiler_params=pltpu.CompilerParams(
            dimension_semantics=("parallel",)),
    )(noise_f, valid_j, band_b, band_tb)

    total = jnp.sum(psum)
    scale = (jnp.float32(total_elems)
             / jnp.maximum(total, jnp.float32(1.0))).reshape(1, 1)

    # ---- kernel 2: out = x * mask * scale  (lane-dense elementwise) ---------
    lanes = _pick_lane_width(total_elems)
    if lanes is not None:
        rows = total_elems // lanes
        rb = _pick_row_block(rows, lanes * 4)
        out = pl.pallas_call(
            _dropblock_apply_kernel,
            out_shape=jax.ShapeDtypeStruct((rows, lanes), x.dtype),
            grid=(rows // rb,),
            in_specs=[pl.BlockSpec((rb, lanes), lambda i: (i, 0)),
                      pl.BlockSpec((rb, lanes), lambda i: (i, 0)),
                      pl.BlockSpec(memory_space=pltpu.MemorySpace.SMEM)],
            out_specs=pl.BlockSpec((rb, lanes), lambda i: (i, 0)),
            compiler_params=pltpu.CompilerParams(
                dimension_semantics=("parallel",)),
        )(x.reshape(rows, lanes), mask.reshape(rows, lanes), scale)
    else:
        # Fallback (element count not a multiple of 128): channel-tiled apply.
        out = pl.pallas_call(
            _dropblock_apply_kernel,
            out_shape=jax.ShapeDtypeStruct((nchan, height, width), x.dtype),
            grid=(num_tiles,),
            in_specs=[pl.BlockSpec((c_tile, height, width), lambda i: (i, 0, 0)),
                      pl.BlockSpec((c_tile, height, width), lambda i: (i, 0, 0)),
                      pl.BlockSpec(memory_space=pltpu.MemorySpace.SMEM)],
            out_specs=pl.BlockSpec((c_tile, height, width), lambda i: (i, 0, 0)),
            compiler_params=pltpu.CompilerParams(
                dimension_semantics=("parallel",)),
        )(x.reshape(nchan, height, width), mask, scale)

    return out.reshape(nb, nc, height, width)


# ----------------------------------------------------------------------------
# Pure-JAX reference (mirrors the torch forward) for correctness checking.
# ----------------------------------------------------------------------------
def dropblock_reference(x, noise, *, block_size, keep_prob,
                        current_step, train_steps):
    ratio = current_step / train_steps
    kp = 1.0 - ratio * (1.0 - keep_prob)
    nb, nc, H, W = x.shape
    bs = min(block_size, W)
    gamma = (1.0 - kp) * W ** 2 / bs ** 2 / (W - bs + 1) ** 2
    r = jnp.arange(H)[:, None]
    c = jnp.arange(W)[None, :]
    lo = bs // 2
    hi = W - (bs - 1) // 2
    valid = (r >= lo) & (r < hi) & (c >= lo) & (c < hi)
    seed = jnp.where(valid[None, None] & (noise < gamma), 0.0, 1.0)
    seed = seed.astype(jnp.float32)
    if bs == W:
        mask = jnp.broadcast_to(jnp.min(seed, axis=(2, 3), keepdims=True),
                                seed.shape)
    else:
        pad = bs // 2
        mask = -jax.lax.reduce_window(
            -seed, -jnp.inf, jax.lax.max,
            window_dimensions=(1, 1, bs, bs),
            window_strides=(1, 1, 1, 1),
            padding=((0, 0), (0, 0), (pad, pad), (pad, pad)))
    return mask * x * (mask.size / jnp.sum(mask))


if __name__ == "__main__":
    # Module config (deterministic, no learnable parameters).
    block_size = 7
    keep_prob = 0.9
    current_step = 1000.0
    train_steps = 1000.0   # ratio = 1.0 -> effective keep_prob = 0.9 (< 1, drop path runs)

    key = jax.random.PRNGKey(0)
    kx, kn = jax.random.split(key)
    x = jax.random.normal(kx, (2, 4, 16, 16), dtype=jnp.float32)
    # torch.rand(x.size()) equivalent: uniform [0, 1) noise, generated once here.
    noise = jax.random.uniform(kn, (2, 4, 16, 16), dtype=jnp.float32)

    out = dropblock_forward(x, noise, block_size=block_size, keep_prob=keep_prob,
                            current_step=current_step, train_steps=train_steps,
                            training=True)
    out = jax.block_until_ready(out)

    ref = dropblock_reference(x, noise, block_size=block_size, keep_prob=keep_prob,
                              current_step=current_step, train_steps=train_steps)
    np.testing.assert_allclose(np.asarray(out), np.asarray(ref),
                               rtol=1e-5, atol=1e-5)

    print("KERNEL_OK")
</pallas_src>

<mosaic_0001>
module attributes {stable_mosaic.version = 11 : i64} {
  func.func @_dropblock_mask_kernel(%arg0: i32, %arg1: memref<8x16x16xf32, #tpu.memory_space<vmem>>, %arg2: memref<16x16xf32, #tpu.memory_space<vmem>>, %arg3: memref<8x16x16xbf16, #tpu.memory_space<vmem>>, %arg4: memref<8x16x16xbf16, #tpu.memory_space<vmem>>, %arg5: memref<8x16x16xbf16, #tpu.memory_space<vmem>>, %arg6: memref<1x1x1xf32, #tpu.memory_space<vmem>>) attributes {dimension_semantics = [#tpu.dimension_semantics<parallel>], iteration_bounds = array<i64: 1>, scalar_prefetch = 0 : i64, scratch_operands = 0 : i64, tpu.core_type = #tpu.core_type<tc>, window_params = [{transform_indices = @transform_0, window_bounds = array<i64: 8, 16, 16>}, {pipeline_mode = #tpu.pipeline_mode<synchronous>, transform_indices = @transform_1, window_bounds = array<i64: 16, 16>}, {pipeline_mode = #tpu.pipeline_mode<synchronous>, transform_indices = @transform_2, window_bounds = array<i64: 8, 16, 16>}, {pipeline_mode = #tpu.pipeline_mode<synchronous>, transform_indices = @transform_3, window_bounds = array<i64: 8, 16, 16>}, {transform_indices = @transform_4, window_bounds = array<i64: 8, 16, 16>}, {transform_indices = @transform_5, window_bounds = array<i64: 1, 1, 1>}]} {
    %c0 = arith.constant 0 : index
    %c0_0 = arith.constant 0 : index
    %c0_1 = arith.constant 0 : index
    %0 = vector.load %arg1[%c0, %c0_0, %c0_1] : memref<8x16x16xf32, #tpu.memory_space<vmem>>, vector<8x16x16xf32>
    %c0_2 = arith.constant 0 : index
    %c0_3 = arith.constant 0 : index
    %1 = vector.load %arg2[%c0_2, %c0_3] : memref<16x16xf32, #tpu.memory_space<vmem>>, vector<16x16xf32>
    %cst = arith.constant 0.00522448961 : f32
    %2 = vector.broadcast %cst : f32 to vector<8x16x16xf32>
    %3 = arith.cmpf olt, %0, %2 : vector<8x16x16xf32>
    %cst_4 = arith.constant 1.000000e+00 : f32
    %cst_5 = arith.constant 0.000000e+00 : f32
    %4 = vector.broadcast %cst_4 : f32 to vector<8x16x16xf32>
    %5 = vector.broadcast %cst_5 : f32 to vector<8x16x16xf32>
    %6 = arith.select %3, %4, %5 : vector<8x16x16xi1>, vector<8x16x16xf32>
    %7 = vector.shape_cast %1 : vector<16x16xf32> to vector<1x16x16xf32>
    %8 = vector.broadcast %7 : vector<1x16x16xf32> to vector<8x16x16xf32>
    %9 = arith.mulf %6, %8 : vector<8x16x16xf32>
    %10 = arith.truncf %9 : vector<8x16x16xf32> to vector<8x16x16xbf16>
    %c0_6 = arith.constant 0 : index
    %c0_7 = arith.constant 0 : index
    %c0_8 = arith.constant 0 : index
    %11 = vector.load %arg4[%c0_6, %c0_7, %c0_8] : memref<8x16x16xbf16, #tpu.memory_space<vmem>>, vector<8x16x16xbf16>
    "tpu.trace_start"() <{level = 10 : i32, message = "chw,cwj->chj"}> : () -> ()
    %cst_9 = arith.constant dense<0.000000e+00> : vector<8x16x16xf32>
    %12 = tpu.matmul %10, %11, %cst_9 {dimension_numbers = #tpu.dot_dimension_numbers<[2], [1], [1], [2], [0, 0, 0, 1, 1, 2], [0], [0]>} : vector<8x16x16xbf16>, vector<8x16x16xbf16>, vector<8x16x16xf32> -> vector<8x16x16xf32>
    "tpu.trace_stop"() : () -> ()
    %c0_10 = arith.constant 0 : index
    %c0_11 = arith.constant 0 : index
    %c0_12 = arith.constant 0 : index
    %13 = vector.load %arg3[%c0_10, %c0_11, %c0_12] : memref<8x16x16xbf16, #tpu.memory_space<vmem>>, vector<8x16x16xbf16>
    %14 = arith.truncf %12 : vector<8x16x16xf32> to vector<8x16x16xbf16>
    "tpu.trace_start"() <{level = 10 : i32, message = "cih,chj->cij"}> : () -> ()
    %cst_13 = arith.constant dense<0.000000e+00> : vector<8x16x16xf32>
    %15 = tpu.matmul %13, %14, %cst_13 {dimension_numbers = #tpu.dot_dimension_numbers<[2], [1], [1], [2], [0, 0, 0, 1, 1, 2], [0], [0]>} : vector<8x16x16xbf16>, vector<8x16x16xbf16>, vector<8x16x16xf32> -> vector<8x16x16xf32>
    %cst_14 = arith.constant 5.000000e-01 : f32
    "tpu.trace_stop"() : () -> ()
    %16 = vector.broadcast %cst_14 : f32 to vector<8x16x16xf32>
    %17 = arith.cmpf olt, %15, %16 : vector<8x16x16xf32>
    %cst_15 = arith.constant 1.000000e+00 : f32
    %cst_16 = arith.constant 0.000000e+00 : f32
    %18 = vector.broadcast %cst_15 : f32 to vector<8x16x16xf32>
    %19 = vector.broadcast %cst_16 : f32 to vector<8x16x16xf32>
    %20 = arith.select %17, %18, %19 : vector<8x16x16xi1>, vector<8x16x16xf32>
    %21 = arith.truncf %20 : vector<8x16x16xf32> to vector<8x16x16xbf16>
    %c0_17 = arith.constant 0 : index
    %c0_18 = arith.constant 0 : index
    %c0_19 = arith.constant 0 : index
    %22 = vector.load %arg5[%c0_17, %c0_18, %c0_19] : memref<8x16x16xbf16, #tpu.memory_space<vmem>>, vector<8x16x16xbf16>
    tpu.vector_store %arg5[%c0_17, %c0_18, %c0_19], %21 {strides = array<i32>} : memref<8x16x16xbf16, #tpu.memory_space<vmem>>, vector<8x16x16xbf16>,
    %23 = vector.shape_cast %20 : vector<8x16x16xf32> to vector<1x8x16x16xf32>
    %cst_20 = arith.constant dense<0.000000e+00> : vector<1xf32>
    %24 = vector.multi_reduction <add>, %23, %cst_20 [1, 2, 3] : vector<1x8x16x16xf32> to vector<1xf32>
    %25 = vector.shape_cast %24 : vector<1xf32> to vector<1x1x1x1xf32>
    %26 = vector.extract %25[0, 0, 0, 0] : f32 from vector<1x1x1x1xf32>
    %27 = vector.broadcast %26 : f32 to vector<1x1x1xf32>
    %c0_21 = arith.constant 0 : index
    %c0_22 = arith.constant 0 : index
    %c0_23 = arith.constant 0 : index
    %28 = vector.load %arg6[%c0_21, %c0_22, %c0_23] : memref<1x1x1xf32, #tpu.memory_space<vmem>>, vector<1x1x1xf32>
    tpu.vector_store %arg6[%c0_21, %c0_22, %c0_23], %27 {strides = array<i32>} : memref<1x1x1xf32, #tpu.memory_space<vmem>>, vector<1x1x1xf32>,
    return
  }
  func.func @transform_0(%arg0: i32) -> (i32, i32, i32) {
    %c0_i32 = arith.constant 0 : i32
    %c0_i32_0 = arith.constant 0 : i32
    %c0_i32_1 = arith.constant 0 : i32
    return %arg0, %c0_i32, %c0_i32_0 : i32, i32, i32
  }
  func.func @transform_1(%arg0: i32) -> (i32, i32) {
    %c0_i32 = arith.constant 0 : i32
    %c0_i32_0 = arith.constant 0 : i32
    %c0_i32_1 = arith.constant 0 : i32
    return %c0_i32, %c0_i32_0 : i32, i32
  }
  func.func @transform_2(%arg0: i32) -> (i32, i32, i32) {
    %c0_i32 = arith.constant 0 : i32
    %c0_i32_0 = arith.constant 0 : i32
    %c0_i32_1 = arith.constant 0 : i32
    %c0_i32_2 = arith.constant 0 : i32
    return %c0_i32, %c0_i32_0, %c0_i32_1 : i32, i32, i32
  }
  func.func @transform_3(%arg0: i32) -> (i32, i32, i32) {
    %c0_i32 = arith.constant 0 : i32
    %c0_i32_0 = arith.constant 0 : i32
    %c0_i32_1 = arith.constant 0 : i32
    %c0_i32_2 = arith.constant 0 : i32
    return %c0_i32, %c0_i32_0, %c0_i32_1 : i32, i32, i32
  }
  func.func @transform_4(%arg0: i32) -> (i32, i32, i32) {
    %c0_i32 = arith.constant 0 : i32
    %c0_i32_0 = arith.constant 0 : i32
    %c0_i32_1 = arith.constant 0 : i32
    return %arg0, %c0_i32, %c0_i32_0 : i32, i32, i32
  }
  func.func @transform_5(%arg0: i32) -> (i32, i32, i32) {
    %c0_i32 = arith.constant 0 : i32
    %c0_i32_0 = arith.constant 0 : i32
    %c0_i32_1 = arith.constant 0 : i32
    return %arg0, %c0_i32, %c0_i32_0 : i32, i32, i32
  }
}

</mosaic_0001>

<llo_original>
// kernel: tpu_custom_call.1
$region0: #{tpu_custom_call.1}
  #allocation0 [shape = 'u32[]', space=smem, size = 0x4, offset = 0x4, fixed_abs, tag = 'smem constant byte address 0x4 - core index']
  #allocation1 [shape = 'u32[144,128]{1,0:T(1,128)}', space=vmem, size = 0x12000, scoped, tag = 'internal scratch']
  %s0 = inlined_call_operand.hbm [shape: f32[8,16,16], index: 0, kind: input, shape index: {}]
  %s1 = inlined_call_operand.hbm [shape: f32[16,16], index: 1, kind: input, shape index: {}]
  %s2 = inlined_call_operand.hbm [shape: bf16[8,16,16], index: 2, kind: input, shape index: {}]
  %s3 = inlined_call_operand.hbm [shape: bf16[8,16,16], index: 3, kind: input, shape index: {}]
  %s4 = inlined_call_operand.hbm [shape: bf16[8,16,16], index: 4, kind: output, shape index: {0}]
  %s5 = inlined_call_operand.hbm [shape: f32[1,1,1], index: 5, kind: output, shape index: {1}]
  %6 = xla_tuple %s4, %s5
  %s7 = sld [smem:[#allocation0]]
  $region50: #{tpu_custom_call.1} parent=0
    _
  %s9 = ssub.s32 1, %s7
  %s10 = scalar_select 0, %s9, %s7
  $region1: #{tpu_custom_call.1} parent=0
    #allocation2 [shape = 'u8[65536]{0}', space=vmem, size = 0x10000, scoped, tag = 'input window, operand 0, single buffered']
    #allocation3 [shape = 's32[1]{0}', space=sflag, size = 0x4, scoped, tag = 'scoped memory for tpu_custom_call.1']
    #allocation4 [shape = 's32[1]{0}', space=sflag, size = 0x4, scoped, tag = 'scoped memory for tpu_custom_call.1']
    #allocation5 [shape = 'u8[8192]{0}', space=vmem, size = 0x2000, scoped, tag = 'input window, operand 1, single buffered']
    #allocation6 [shape = 's32[1]{0}', space=sflag, size = 0x4, scoped, tag = 'scoped memory for tpu_custom_call.1']
    #allocation7 [shape = 'u8[32768]{0}', space=vmem, size = 0x8000, scoped, tag = 'input window, operand 2, single buffered']
    #allocation8 [shape = 'u8[32768]{0}', space=vmem, size = 0x8000, scoped, tag = 'input window, operand 3, single buffered']
    #allocation9 [shape = 's32[1]{0}', space=sflag, size = 0x4, scoped, tag = 'scoped memory for tpu_custom_call.1']
    #allocation10 [shape = 'u8[32768]{0}', space=vmem, size = 0x8000, scoped, tag = 'output window, operand 0, single buffered']
    #allocation11 [shape = 'u8[512]{0}', space=vmem, size = 0x400, scoped, tag = 'output window, operand 1, single buffered']
    #allocation12 [shape = 's32[1]{0}', space=sflag, size = 0x4, scoped, tag = 'scoped memory for tpu_custom_call.1']
    %11 = vsyncpa [#allocation3], 0
    %12 = vsyncpa [#allocation6], 0
    %13 = vsyncpa [#allocation9], 0
    %14 = vsyncpa [#allocation4], 0
    %15 = vsyncpa [#allocation12], 0
    // Predicated region
    $region2: #{tpu_custom_call.1} parent=1 // pred_check
      _
    $region3: #{tpu_custom_call.1} parent=1 // pred_check_branch
      %17 = sbr.rel (0) target = $region5
    $region4: #{tpu_custom_call.1} parent=1 // pred_region
      %s19 = ssub.s32 2048, 2048
      %20 = vsyncadd [#allocation3], %s19
      %s21 = sshll.u32 [#allocation2], 4
      %s22 = int_to_ptr.vmem [resolvable:$true] %s21
      %27 = dma.hbm_to_vmem [thread:$0]  %s0, 2048, %s22, [#allocation3], 128, 128, 8
    $region5: #{tpu_custom_call.1} parent=1 // pred_fallthru
      _
    // Predicated region
    $region6: #{tpu_custom_call.1} parent=1 // pred_check
      _
    $region7: #{tpu_custom_call.1} parent=1 // pred_check_branch
      %29 = sbr.rel (0) target = $region9
    $region8: #{tpu_custom_call.1} parent=1 // pred_region
      %s31 = ssub.s32 256, 256
      %32 = vsyncadd [#allocation6], %s31
      %s33 = sshll.u32 [#allocation5], 4
      %s34 = int_to_ptr.vmem [resolvable:$true] %s33
      %39 = dma.hbm_to_vmem [thread:$0]  %s1, 256, %s34, [#allocation6], 128, 128, 8
    $region9: #{tpu_custom_call.1} parent=1 // pred_fallthru
      _
    // Predicated region
    $region10: #{tpu_custom_call.1} parent=1 // pred_check
      _
    $region11: #{tpu_custom_call.1} parent=1 // pred_check_branch
      %41 = sbr.rel (0) target = $region13
    $region12: #{tpu_custom_call.1} parent=1 // pred_region
      %s43 = ssub.s32 1024, 1024
      %44 = vsyncadd [#allocation6], %s43
      %s45 = sshll.u32 [#allocation7], 4
      %s46 = int_to_ptr.vmem [resolvable:$true] %s45
      %51 = dma.hbm_to_vmem [thread:$0]  %s2, 1024, %s46, [#allocation6], 64, 64, 4
    $region13: #{tpu_custom_call.1} parent=1 // pred_fallthru
      _
    // Predicated region
    $region14: #{tpu_custom_call.1} parent=1 // pred_check
      _
    $region15: #{tpu_custom_call.1} parent=1 // pred_check_branch
      %53 = sbr.rel (0) target = $region17
    $region16: #{tpu_custom_call.1} parent=1 // pred_region
      %s55 = ssub.s32 1024, 1024
      %56 = vsyncadd [#allocation9], %s55
      %s57 = sshll.u32 [#allocation8], 4
      %s58 = int_to_ptr.vmem [resolvable:$true] %s57
      %63 = dma.hbm_to_vmem [thread:$0]  %s3, 1024, %s58, [#allocation9], 64, 64, 4
    $region17: #{tpu_custom_call.1} parent=1 // pred_fallthru
      _
    // Predicated region
    $region18: #{tpu_custom_call.1} parent=1 // pred_check
      _
    $region19: #{tpu_custom_call.1} parent=1 // pred_check_branch
      %65 = sbr.rel (0) target = $region21
    $region20: #{tpu_custom_call.1} parent=1 // pred_region
      %66 = dma.done [#allocation3], 2048
    $region21: #{tpu_custom_call.1} parent=1 // pred_fallthru
      _
    // Predicated region
    $region22: #{tpu_custom_call.1} parent=1 // pred_check
      _
    $region23: #{tpu_custom_call.1} parent=1 // pred_check_branch
      %68 = sbr.rel (0) target = $region25
    $region24: #{tpu_custom_call.1} parent=1 // pred_region
      %69 = dma.done [#allocation6], 256
    $region25: #{tpu_custom_call.1} parent=1 // pred_fallthru
      _
    // Predicated region
    $region26: #{tpu_custom_call.1} parent=1 // pred_check
      _
    $region27: #{tpu_custom_call.1} parent=1 // pred_check_branch
      %71 = sbr.rel (0) target = $region29
    $region28: #{tpu_custom_call.1} parent=1 // pred_region
      %72 = dma.done [#allocation6], 1024
    $region29: #{tpu_custom_call.1} parent=1 // pred_fallthru
      _
    // Predicated region
    $region30: #{tpu_custom_call.1} parent=1 // pred_check
      _
    $region31: #{tpu_custom_call.1} parent=1 // pred_check_branch
      %74 = sbr.rel (0) target = $region33
    $region32: #{tpu_custom_call.1} parent=1 // pred_region
      %75 = dma.done [#allocation9], 1024
    $region33: #{tpu_custom_call.1} parent=1 // pred_fallthru
      _
    %v77 = vld [vmem:[#allocation2] sm:$0xff]
    %v78 = vld [vmem:[#allocation2 + $0x8] sm:$0xff]
    %v79 = vld [vmem:[#allocation2 + $0x10] sm:$0xff]
    %v80 = vld [vmem:[#allocation2 + $0x18] sm:$0xff]
    %v81 = vld [vmem:[#allocation2 + $0x20] sm:$0xff]
    %v82 = vld [vmem:[#allocation2 + $0x28] sm:$0xff]
    %v83 = vld [vmem:[#allocation2 + $0x30] sm:$0xff]
    %v84 = vld [vmem:[#allocation2 + $0x38] sm:$0xff]
    %v85 = vld [vmem:[#allocation2 + $0x40] sm:$0xff]
    %v86 = vld [vmem:[#allocation2 + $0x48] sm:$0xff]
    %v87 = vld [vmem:[#allocation2 + $0x50] sm:$0xff]
    %v88 = vld [vmem:[#allocation2 + $0x58] sm:$0xff]
    %v89 = vld [vmem:[#allocation2 + $0x60] sm:$0xff]
    %v90 = vld [vmem:[#allocation2 + $0x68] sm:$0xff]
    %v91 = vld [vmem:[#allocation2 + $0x70] sm:$0xff]
    %v92 = vld [vmem:[#allocation2 + $0x78] sm:$0xff]
    %v93 = vld [vmem:[#allocation5] sm:$0xff]
    %v94 = vld [vmem:[#allocation5 + $0x8] sm:$0xff]
    %vm95 = vcmp.lt.f32.partialorder %v77, 0.0052244896
    %vm96 = vcmp.lt.f32.partialorder %v78, 0.0052244896
    %vm97 = vcmp.lt.f32.partialorder %v79, 0.0052244896
    %vm98 = vcmp.lt.f32.partialorder %v80, 0.0052244896
    %vm99 = vcmp.lt.f32.partialorder %v81, 0.0052244896
    %vm100 = vcmp.lt.f32.partialorder %v82, 0.0052244896
    %vm101 = vcmp.lt.f32.partialorder %v83, 0.0052244896
    %vm102 = vcmp.lt.f32.partialorder %v84, 0.0052244896
    %vm103 = vcmp.lt.f32.partialorder %v85, 0.0052244896
    %vm104 = vcmp.lt.f32.partialorder %v86, 0.0052244896
    %vm105 = vcmp.lt.f32.partialorder %v87, 0.0052244896
    %vm106 = vcmp.lt.f32.partialorder %v88, 0.0052244896
    %vm107 = vcmp.lt.f32.partialorder %v89, 0.0052244896
    %vm108 = vcmp.lt.f32.partialorder %v90, 0.0052244896
    %vm109 = vcmp.lt.f32.partialorder %v91, 0.0052244896
    %vm110 = vcmp.lt.f32.partialorder %v92, 0.0052244896
    %v111 = vsel %vm95, 1.0, 0.0
    %v112 = vsel %vm96, 1.0, 0.0
    %v113 = vsel %vm97, 1.0, 0.0
    %v114 = vsel %vm98, 1.0, 0.0
    %v115 = vsel %vm99, 1.0, 0.0
    %v116 = vsel %vm100, 1.0, 0.0
    %v117 = vsel %vm101, 1.0, 0.0
    %v118 = vsel %vm102, 1.0, 0.0
    %v119 = vsel %vm103, 1.0, 0.0
    %v120 = vsel %vm104, 1.0, 0.0
    %v121 = vsel %vm105, 1.0, 0.0
    %v122 = vsel %vm106, 1.0, 0.0
    %v123 = vsel %vm107, 1.0, 0.0
    %v124 = vsel %vm108, 1.0, 0.0
    %v125 = vsel %vm109, 1.0, 0.0
    %v126 = vsel %vm110, 1.0, 0.0
    %v127 = vmul.f32 %v111, %v93
    %v128 = vmul.f32 %v112, %v94
    %v129 = vmul.f32 %v113, %v93
    %v130 = vmul.f32 %v114, %v94
    %v131 = vmul.f32 %v115, %v93
    %v132 = vmul.f32 %v116, %v94
    %v133 = vmul.f32 %v117, %v93
    %v134 = vmul.f32 %v118, %v94
    %v135 = vmul.f32 %v119, %v93
    %v136 = vmul.f32 %v120, %v94
    %v137 = vmul.f32 %v121, %v93
    %v138 = vmul.f32 %v122, %v94
    %v139 = vmul.f32 %v123, %v93
    %v140 = vmul.f32 %v124, %v94
    %v141 = vmul.f32 %v125, %v93
    %v142 = vmul.f32 %v126, %v94
    %v143 = vpack.c.bf16 %v128, %v127
    %v144 = vpack.c.bf16 %v130, %v129
    %v145 = vpack.c.bf16 %v132, %v131
    %v146 = vpack.c.bf16 %v134, %v133
    %v147 = vpack.c.bf16 %v136, %v135
    %v148 = vpack.c.bf16 %v138, %v137
    %v149 = vpack.c.bf16 %v140, %v139
    %v150 = vpack.c.bf16 %v142, %v141
    %v151 = vld [vmem:[#allocation8] sm:$0xf]
    %v152 = vld [vmem:[#allocation8 + $0x4] sm:$0xf]
    %v153 = vld [vmem:[#allocation8 + $0x8] sm:$0xf]
    %v154 = vld [vmem:[#allocation8 + $0xc] sm:$0xf]
    %v155 = vld [vmem:[#allocation8 + $0x10] sm:$0xf]
    %v156 = vld [vmem:[#allocation8 + $0x14] sm:$0xf]
    %v157 = vld [vmem:[#allocation8 + $0x18] sm:$0xf]
    %v158 = vld [vmem:[#allocation8 + $0x1c] sm:$0xf]
    %v159 = vld [vmem:[#allocation8 + $0x20] sm:$0xf]
    %v160 = vld [vmem:[#allocation8 + $0x24] sm:$0xf]
    %v161 = vld [vmem:[#allocation8 + $0x28] sm:$0xf]
    %v162 = vld [vmem:[#allocation8 + $0x2c] sm:$0xf]
    %v163 = vld [vmem:[#allocation8 + $0x30] sm:$0xf]
    %v164 = vld [vmem:[#allocation8 + $0x34] sm:$0xf]
    %v165 = vld [vmem:[#allocation8 + $0x38] sm:$0xf]
    %v166 = vld [vmem:[#allocation8 + $0x3c] sm:$0xf]
    %v169 = vunpack.c.l.b16 %v151
    %v170 = vunpack.c.l.b16 %v152
    %v171 = vpack.c.b16 %v170, %v169
    %vm173 = vcmask 130048
    %v175 = vsel %vm173, %v143, 0
    %177 = vmatprep.subr.bf16.mxu0 0
    %178 = vmatpush1.bf16.msra.mxu0 0
    %179 = vmatprep.subr.bf16.mxu0 0
    %180 = vmatpush1.bf16.msra.mxu0 0
    %181 = vmatprep.subr.bf16.mxu0 0
    %182 = vmatpush1.bf16.msra.mxu0 0
    %183 = vmatprep.subr.bf16.mxu0 0
    %184 = vmatpush1.bf16.msra.mxu0 0
    %185 = vmatprep.subr.bf16.mxu0 0
    %186 = vmatpush1.bf16.msra.mxu0 0
    %187 = vmatprep.subr.bf16.mxu0 0
    %188 = vmatpush1.bf16.msra.mxu0 0
    %189 = vmatprep.subr.bf16.mxu0 0
    %190 = vmatpush1.bf16.msra.mxu0 0
    %191 = vmatprep.subr.bf16.mxu0 0
    %192 = vmatpush1.bf16.msra.mxu0 %v171
    %193 = vmatprep.subr.bf16.mxu0 0
    %194 = vmatpush2.bf16.msra.mxu0 0
    %195 = vmatprep.subr.bf16.mxu0 0
    %196 = vmatpush2.bf16.msra.mxu0 0
    %197 = vmatprep.subr.bf16.mxu0 0
    %198 = vmatpush2.bf16.msra.mxu0 0
    %199 = vmatprep.subr.bf16.mxu0 0
    %200 = vmatpush2.bf16.msra.mxu0 0
    %201 = vmatprep.subr.bf16.mxu0 0
    %202 = vmatpush2.bf16.msra.mxu0 0
    %203 = vmatprep.subr.bf16.mxu0 0
    %204 = vmatpush2.bf16.msra.mxu0 0
    %205 = vmatprep.subr.bf16.mxu0 0
    %206 = vmatpush2.bf16.msra.mxu0 0
    %207 = vmatprep.subr.bf16.mxu0 0
    %208 = vmatpush2.bf16.msra.mxu0 0
    %209 = vmatprep.mubr.bf16.mxu0 0
    %210 = vmatmul.mubr.bf16.gmra.mxu0 %v175
    %v211 = vpop.f32.mrf.mxu0
    %v212 = vadd.f32 0.0, %v211
    %v213 = vpop.f32.mrf.mxu0
    %v214 = vpop.f32.mrf.mxu0
    %v215 = vadd.f32 0.0, %v214
    %v216 = vpop.f32.mrf.mxu0
    %217 = vdwg.mxu0
    %v220 = vunpack.c.l.b16 %v153
    %v221 = vunpack.c.l.b16 %v154
    %v222 = vpack.c.b16 %v221, %v220
    %v225 = vsel %vm173, %v144, 0
    %227 = vmatprep.subr.bf16.mxu0 0
    %228 = vmatpush1.bf16.msra.mxu0 0
    %229 = vmatprep.subr.bf16.mxu0 0
    %230 = vmatpush1.bf16.msra.mxu0 0
    %231 = vmatprep.subr.bf16.mxu0 0
    %232 = vmatpush1.bf16.msra.mxu0 0
    %233 = vmatprep.subr.bf16.mxu0 0
    %234 = vmatpush1.bf16.msra.mxu0 0
    %235 = vmatprep.subr.bf16.mxu0 0
    %236 = vmatpush1.bf16.msra.mxu0 0
    %237 = vmatprep.subr.bf16.mxu0 0
    %238 = vmatpush1.bf16.msra.mxu0 0
    %239 = vmatprep.subr.bf16.mxu0 0
    %240 = vmatpush1.bf16.msra.mxu0 0
    %241 = vmatprep.subr.bf16.mxu0 0
    %242 = vmatpush1.bf16.msra.mxu0 %v222
    %243 = vmatprep.subr.bf16.mxu0 0
    %244 = vmatpush2.bf16.msra.mxu0 0
    %245 = vmatprep.subr.bf16.mxu0 0
    %246 = vmatpush2.bf16.msra.mxu0 0
    %247 = vmatprep.subr.bf16.mxu0 0
    %248 = vmatpush2.bf16.msra.mxu0 0
    %249 = vmatprep.subr.bf16.mxu0 0
    %250 = vmatpush2.bf16.msra.mxu0 0
    %251 = vmatprep.subr.bf16.mxu0 0
    %252 = vmatpush2.bf16.msra.mxu0 0
    %253 = vmatprep.subr.bf16.mxu0 0
    %254 = vmatpush2.bf16.msra.mxu0 0
    %255 = vmatprep.subr.bf16.mxu0 0
    %256 = vmatpush2.bf16.msra.mxu0 0
    %257 = vmatprep.subr.bf16.mxu0 0
    %258 = vmatpush2.bf16.msra.mxu0 0
    %259 = vmatprep.mubr.bf16.mxu0 0
    %260 = vmatmul.mubr.bf16.gmra.mxu0 %v225
    %v261 = vpop.f32.mrf.mxu0
    %v262 = vadd.f32 0.0, %v261
    %v263 = vpop.f32.mrf.mxu0
    %v264 = vpop.f32.mrf.mxu0
    %v265 = vadd.f32 0.0, %v264
    %v266 = vpop.f32.mrf.mxu0
    %267 = vdwg.mxu0
    %v270 = vunpack.c.l.b16 %v155
    %v271 = vunpack.c.l.b16 %v156
    %v272 = vpack.c.b16 %v271, %v270
    %v275 = vsel %vm173, %v145, 0
    %277 = vmatprep.subr.bf16.mxu0 0
    %278 = vmatpush1.bf16.msra.mxu0 0
    %279 = vmatprep.subr.bf16.mxu0 0
    %280 = vmatpush1.bf16.msra.mxu0 0
    %281 = vmatprep.subr.bf16.mxu0 0
    %282 = vmatpush1.bf16.msra.mxu0 0
    %283 = vmatprep.subr.bf16.mxu0 0
    %284 = vmatpush1.bf16.msra.mxu0 0
    %285 = vmatprep.subr.bf16.mxu0 0
    %286 = vmatpush1.bf16.msra.mxu0 0
    %287 = vmatprep.subr.bf16.mxu0 0
    %288 = vmatpush1.bf16.msra.mxu0 0
    %289 = vmatprep.subr.bf16.mxu0 0
    %290 = vmatpush1.bf16.msra.mxu0 0
    %291 = vmatprep.subr.bf16.mxu0 0
    %292 = vmatpush1.bf16.msra.mxu0 %v272
    %293 = vmatprep.subr.bf16.mxu0 0
    %294 = vmatpush2.bf16.msra.mxu0 0
    %295 = vmatprep.subr.bf16.mxu0 0
    %296 = vmatpush2.bf16.msra.mxu0 0
    %297 = vmatprep.subr.bf16.mxu0 0
    %298 = vmatpush2.bf16.msra.mxu0 0
    %299 = vmatprep.subr.bf16.mxu0 0
    %300 = vmatpush2.bf16.msra.mxu0 0
    %301 = vmatprep.subr.bf16.mxu0 0
    %302 = vmatpush2.bf16.msra.mxu0 0
    %303 = vmatprep.subr.bf16.mxu0 0
    %304 = vmatpush2.bf16.msra.mxu0 0
    %305 = vmatprep.subr.bf16.mxu0 0
    %306 = vmatpush2.bf16.msra.mxu0 0
    %307 = vmatprep.subr.bf16.mxu0 0
    %308 = vmatpush2.bf16.msra.mxu0 0
    %309 = vmatprep.mubr.bf16.mxu0 0
    %310 = vmatmul.mubr.bf16.gmra.mxu0 %v275
    %v311 = vpop.f32.mrf.mxu0
    %v312 = vadd.f32 0.0, %v311
    %v313 = vpop.f32.mrf.mxu0
    %v314 = vpop.f32.mrf.mxu0
    %v315 = vadd.f32 0.0, %v314
    %v316 = vpop.f32.mrf.mxu0
    %317 = vdwg.mxu0
    %v320 = vunpack.c.l.b16 %v157
    %v321 = vunpack.c.l.b16 %v158
    %v322 = vpack.c.b16 %v321, %v320
    %v325 = vsel %vm173, %v146, 0
    %327 = vmatprep.subr.bf16.mxu0 0
    %328 = vmatpush1.bf16.msra.mxu0 0
    %329 = vmatprep.subr.bf16.mxu0 0
    %330 = vmatpush1.bf16.msra.mxu0 0
    %331 = vmatprep.subr.bf16.mxu0 0
    %332 = vmatpush1.bf16.msra.mxu0 0
    %333 = vmatprep.subr.bf16.mxu0 0
    %334 = vmatpush1.bf16.msra.mxu0 0
    %335 = vmatprep.subr.bf16.mxu0 0
    %336 = vmatpush1.bf16.msra.mxu0 0
    %337 = vmatprep.subr.bf16.mxu0 0
    %338 = vmatpush1.bf16.msra.mxu0 0
    %339 = vmatprep.subr.bf16.mxu0 0
    %340 = vmatpush1.bf16.msra.mxu0 0
    %341 = vmatprep.subr.bf16.mxu0 0
    %342 = vmatpush1.bf16.msra.mxu0 %v322
    %343 = vmatprep.subr.bf16.mxu0 0
    %344 = vmatpush2.bf16.msra.mxu0 0
    %345 = vmatprep.subr.bf16.mxu0 0
    %346 = vmatpush2.bf16.msra.mxu0 0
    %347 = vmatprep.subr.bf16.mxu0 0
    %348 = vmatpush2.bf16.msra.mxu0 0
    %349 = vmatprep.subr.bf16.mxu0 0
    %350 = vmatpush2.bf16.msra.mxu0 0
    %351 = vmatprep.subr.bf16.mxu0 0
    %352 = vmatpush2.bf16.msra.mxu0 0
    %353 = vmatprep.subr.bf16.mxu0 0
    %354 = vmatpush2.bf16.msra.mxu0 0
    %355 = vmatprep.subr.bf16.mxu0 0
    %356 = vmatpush2.bf16.msra.mxu0 0
    %357 = vmatprep.subr.bf16.mxu0 0
    %358 = vmatpush2.bf16.msra.mxu0 0
    %359 = vmatprep.mubr.bf16.mxu0 0
    %360 = vmatmul.mubr.bf16.gmra.mxu0 %v325
    %v361 = vpop.f32.mrf.mxu0
    %v362 = vadd.f32 0.0, %v361
    %v363 = vpop.f32.mrf.mxu0
    %v364 = vpop.f32.mrf.mxu0
    %v365 = vadd.f32 0.0, %v364
    %v366 = vpop.f32.mrf.mxu0
    %367 = vdwg.mxu0
    %v370 = vunpack.c.l.b16 %v159
    %v371 = vunpack.c.l.b16 %v160
    %v372 = vpack.c.b16 %v371, %v370
    %v375 = vsel %vm173, %v147, 0
    %377 = vmatprep.subr.bf16.mxu0 0
    %378 = vmatpush1.bf16.msra.mxu0 0
    %379 = vmatprep.subr.bf16.mxu0 0
    %380 = vmatpush1.bf16.msra.mxu0 0
    %381 = vmatprep.subr.bf16.mxu0 0
    %382 = vmatpush1.bf16.msra.mxu0 0
    %383 = vmatprep.subr.bf16.mxu0 0
    %384 = vmatpush1.bf16.msra.mxu0 0
    %385 = vmatprep.subr.bf16.mxu0 0
    %386 = vmatpush1.bf16.msra.mxu0 0
    %387 = vmatprep.subr.bf16.mxu0 0
    %388 = vmatpush1.bf16.msra.mxu0 0
    %389 = vmatprep.subr.bf16.mxu0 0
    %390 = vmatpush1.bf16.msra.mxu0 0
    %391 = vmatprep.subr.bf16.mxu0 0
    %392 = vmatpush1.bf16.msra.mxu0 %v372
    %393 = vmatprep.subr.bf16.mxu0 0
    %394 = vmatpush2.bf16.msra.mxu0 0
    %395 = vmatprep.subr.bf16.mxu0 0
    %396 = vmatpush2.bf16.msra.mxu0 0
    %397 = vmatprep.subr.bf16.mxu0 0
    %398 = vmatpush2.bf16.msra.mxu0 0
    %399 = vmatprep.subr.bf16.mxu0 0
    %400 = vmatpush2.bf16.msra.mxu0 0
    %401 = vmatprep.subr.bf16.mxu0 0
    %402 = vmatpush2.bf16.msra.mxu0 0
    %403 = vmatprep.subr.bf16.mxu0 0
    %404 = vmatpush2.bf16.msra.mxu0 0
    %405 = vmatprep.subr.bf16.mxu0 0
    %406 = vmatpush2.bf16.msra.mxu0 0
    %407 = vmatprep.subr.bf16.mxu0 0
    %408 = vmatpush2.bf16.msra.mxu0 0
    %409 = vmatprep.mubr.bf16.mxu0 0
    %410 = vmatmul.mubr.bf16.gmra.mxu0 %v375
    %v411 = vpop.f32.mrf.mxu0
    %v412 = vadd.f32 0.0, %v411
    %v413 = vpop.f32.mrf.mxu0
    %v414 = vpop.f32.mrf.mxu0
    %v415 = vadd.f32 0.0, %v414
    %v416 = vpop.f32.mrf.mxu0
    %417 = vdwg.mxu0
    %v420 = vunpack.c.l.b16 %v161
    %v421 = vunpack.c.l.b16 %v162
    %v422 = vpack.c.b16 %v421, %v420
    %v425 = vsel %vm173, %v148, 0
    %427 = vmatprep.subr.bf16.mxu0 0
    %428 = vmatpush1.bf16.msra.mxu0 0
    %429 = vmatprep.subr.bf16.mxu0 0
    %430 = vmatpush1.bf16.msra.mxu0 0
    %431 = vmatprep.subr.bf16.mxu0 0
    %432 = vmatpush1.bf16.msra.mxu0 0
    %433 = vmatprep.subr.bf16.mxu0 0
    %434 = vmatpush1.bf16.msra.mxu0 0
    %435 = vmatprep.subr.bf16.mxu0 0
    %436 = vmatpush1.bf16.msra.mxu0 0
    %437 = vmatprep.subr.bf16.mxu0 0
    %438 = vmatpush1.bf16.msra.mxu0 0
    %439 = vmatprep.subr.bf16.mxu0 0
    %440 = vmatpush1.bf16.msra.mxu0 0
    %441 = vmatprep.subr.bf16.mxu0 0
    %442 = vmatpush1.bf16.msra.mxu0 %v422
    %443 = vmatprep.subr.bf16.mxu0 0
    %444 = vmatpush2.bf16.msra.mxu0 0
    %445 = vmatprep.subr.bf16.mxu0 0
    %446 = vmatpush2.bf16.msra.mxu0 0
    %447 = vmatprep.subr.bf16.mxu0 0
    %448 = vmatpush2.bf16.msra.mxu0 0
    %449 = vmatprep.subr.bf16.mxu0 0
    %450 = vmatpush2.bf16.msra.mxu0 0
    %451 = vmatprep.subr.bf16.mxu0 0
    %452 = vmatpush2.bf16.msra.mxu0 0
    %453 = vmatprep.subr.bf16.mxu0 0
    %454 = vmatpush2.bf16.msra.mxu0 0
    %455 = vmatprep.subr.bf16.mxu0 0
    %456 = vmatpush2.bf16.msra.mxu0 0
    %457 = vmatprep.subr.bf16.mxu0 0
    %458 = vmatpush2.bf16.msra.mxu0 0
    %459 = vmatprep.mubr.bf16.mxu0 0
    %460 = vmatmul.mubr.bf16.gmra.mxu0 %v425
    %v461 = vpop.f32.mrf.mxu0
    %v462 = vadd.f32 0.0, %v461
    %v463 = vpop.f32.mrf.mxu0
    %v464 = vpop.f32.mrf.mxu0
    %v465 = vadd.f32 0.0, %v464
    %v466 = vpop.f32.mrf.mxu0
    %467 = vdwg.mxu0
    %v470 = vunpack.c.l.b16 %v163
    %v471 = vunpack.c.l.b16 %v164
    %v472 = vpack.c.b16 %v471, %v470
    %v475 = vsel %vm173, %v149, 0
    %477 = vmatprep.subr.bf16.mxu0 0
    %478 = vmatpush1.bf16.msra.mxu0 0
    %479 = vmatprep.subr.bf16.mxu0 0
    %480 = vmatpush1.bf16.msra.mxu0 0
    %481 = vmatprep.subr.bf16.mxu0 0
    %482 = vmatpush1.bf16.msra.mxu0 0
    %483 = vmatprep.subr.bf16.mxu0 0
    %484 = vmatpush1.bf16.msra.mxu0 0
    %485 = vmatprep.subr.bf16.mxu0 0
    %486 = vmatpush1.bf16.msra.mxu0 0
    %487 = vmatprep.subr.bf16.mxu0 0
    %488 = vmatpush1.bf16.msra.mxu0 0
    %489 = vmatprep.subr.bf16.mxu0 0
    %490 = vmatpush1.bf16.msra.mxu0 0
    %491 = vmatprep.subr.bf16.mxu0 0
    %492 = vmatpush1.bf16.msra.mxu0 %v472
    %493 = vmatprep.subr.bf16.mxu0 0
    %494 = vmatpush2.bf16.msra.mxu0 0
    %495 = vmatprep.subr.bf16.mxu0 0
    %496 = vmatpush2.bf16.msra.mxu0 0
    %497 = vmatprep.subr.bf16.mxu0 0
    %498 = vmatpush2.bf16.msra.mxu0 0
    %499 = vmatprep.subr.bf16.mxu0 0
    %500 = vmatpush2.bf16.msra.mxu0 0
    %501 = vmatprep.subr.bf16.mxu0 0
    %502 = vmatpush2.bf16.msra.mxu0 0
    %503 = vmatprep.subr.bf16.mxu0 0
    %504 = vmatpush2.bf16.msra.mxu0 0
    %505 = vmatprep.subr.bf16.mxu0 0
    %506 = vmatpush2.bf16.msra.mxu0 0
    %507 = vmatprep.subr.bf16.mxu0 0
    %508 = vmatpush2.bf16.msra.mxu0 0
    %509 = vmatprep.mubr.bf16.mxu0 0
    %510 = vmatmul.mubr.bf16.gmra.mxu0 %v475
    %v511 = vpop.f32.mrf.mxu0
    %v512 = vadd.f32 0.0, %v511
    %v513 = vpop.f32.mrf.mxu0
    %v514 = vpop.f32.mrf.mxu0
    %v515 = vadd.f32 0.0, %v514
    %v516 = vpop.f32.mrf.mxu0
    %517 = vdwg.mxu0
    %v520 = vunpack.c.l.b16 %v165
    %v521 = vunpack.c.l.b16 %v166
    %v522 = vpack.c.b16 %v521, %v520
    %v525 = vsel %vm173, %v150, 0
    %527 = vmatprep.subr.bf16.mxu0 0
    %528 = vmatpush1.bf16.msra.mxu0 0
    %529 = vmatprep.subr.bf16.mxu0 0
    %530 = vmatpush1.bf16.msra.mxu0 0
    %531 = vmatprep.subr.bf16.mxu0 0
    %532 = vmatpush1.bf16.msra.mxu0 0
    %533 = vmatprep.subr.bf16.mxu0 0
    %534 = vmatpush1.bf16.msra.mxu0 0
    %535 = vmatprep.subr.bf16.mxu0 0
    %536 = vmatpush1.bf16.msra.mxu0 0
    %537 = vmatprep.subr.bf16.mxu0 0
    %538 = vmatpush1.bf16.msra.mxu0 0
    %539 = vmatprep.subr.bf16.mxu0 0
    %540 = vmatpush1.bf16.msra.mxu0 0
    %541 = vmatprep.subr.bf16.mxu0 0
    %542 = vmatpush1.bf16.msra.mxu0 %v522
    %543 = vmatprep.subr.bf16.mxu0 0
    %544 = vmatpush2.bf16.msra.mxu0 0
    %545 = vmatprep.subr.bf16.mxu0 0
    %546 = vmatpush2.bf16.msra.mxu0 0
    %547 = vmatprep.subr.bf16.mxu0 0
    %548 = vmatpush2.bf16.msra.mxu0 0
    %549 = vmatprep.subr.bf16.mxu0 0
    %550 = vmatpush2.bf16.msra.mxu0 0
    %551 = vmatprep.subr.bf16.mxu0 0
    %552 = vmatpush2.bf16.msra.mxu0 0
    %553 = vmatprep.subr.bf16.mxu0 0
    %554 = vmatpush2.bf16.msra.mxu0 0
    %555 = vmatprep.subr.bf16.mxu0 0
    %556 = vmatpush2.bf16.msra.mxu0 0
    %557 = vmatprep.subr.bf16.mxu0 0
    %558 = vmatpush2.bf16.msra.mxu0 0
    %559 = vmatprep.mubr.bf16.mxu0 0
    %560 = vmatmul.mubr.bf16.gmra.mxu0 %v525
    %v561 = vpop.f32.mrf.mxu0
    %v562 = vadd.f32 0.0, %v561
    %v563 = vpop.f32.mrf.mxu0
    %v564 = vpop.f32.mrf.mxu0
    %v565 = vadd.f32 0.0, %v564
    %v566 = vpop.f32.mrf.mxu0
    %567 = vdwg.mxu0
    %v568 = vld [vmem:[#allocation7] sm:$0xf]
    %v569 = vld [vmem:[#allocation7 + $0x4] sm:$0xf]
    %v570 = vld [vmem:[#allocation7 + $0x8] sm:$0xf]
    %v571 = vld [vmem:[#allocation7 + $0xc] sm:$0xf]
    %v572 = vld [vmem:[#allocation7 + $0x10] sm:$0xf]
    %v573 = vld [vmem:[#allocation7 + $0x14] sm:$0xf]
    %v574 = vld [vmem:[#allocation7 + $0x18] sm:$0xf]
    %v575 = vld [vmem:[#allocation7 + $0x1c] sm:$0xf]
    %v576 = vld [vmem:[#allocation7 + $0x20] sm:$0xf]
    %v577 = vld [vmem:[#allocation7 + $0x24] sm:$0xf]
    %v578 = vld [vmem:[#allocation7 + $0x28] sm:$0xf]
    %v579 = vld [vmem:[#allocation7 + $0x2c] sm:$0xf]
    %v580 = vld [vmem:[#allocation7 + $0x30] sm:$0xf]
    %v581 = vld [vmem:[#allocation7 + $0x34] sm:$0xf]
    %v582 = vld [vmem:[#allocation7 + $0x38] sm:$0xf]
    %v583 = vld [vmem:[#allocation7 + $0x3c] sm:$0xf]
    %v584 = vpack.c.bf16 %v215, %v212
    %v585 = vpack.c.bf16 %v265, %v262
    %v586 = vpack.c.bf16 %v315, %v312
    %v587 = vpack.c.bf16 %v365, %v362
    %v588 = vpack.c.bf16 %v415, %v412
    %v589 = vpack.c.bf16 %v465, %v462
    %v590 = vpack.c.bf16 %v515, %v512
    %v591 = vpack.c.bf16 %v565, %v562
    %v594 = vunpack.c.l.b16 %v568
    %v595 = vunpack.c.l.b16 %v569
    %v596 = vpack.c.b16 %v595, %v594
    %v598 = vsel %vm173, %v596, 0
    %600 = vmatprep.subr.bf16.mxu0 0
    %601 = vmatpush1.bf16.msra.mxu0 0
    %602 = vmatprep.subr.bf16.mxu0 0
    %603 = vmatpush1.bf16.msra.mxu0 0
    %604 = vmatprep.subr.bf16.mxu0 0
    %605 = vmatpush1.bf16.msra.mxu0 0
    %606 = vmatprep.subr.bf16.mxu0 0
    %607 = vmatpush1.bf16.msra.mxu0 0
    %608 = vmatprep.subr.bf16.mxu0 0
    %609 = vmatpush1.bf16.msra.mxu0 0
    %610 = vmatprep.subr.bf16.mxu0 0
    %611 = vmatpush1.bf16.msra.mxu0 0
    %612 = vmatprep.subr.bf16.mxu0 0
    %613 = vmatpush1.bf16.msra.mxu0 0
    %614 = vmatprep.subr.bf16.mxu0 0
    %615 = vmatpush1.bf16.msra.mxu0 %v584
    %616 = vmatprep.subr.bf16.mxu0 0
    %617 = vmatpush2.bf16.msra.mxu0 0
    %618 = vmatprep.subr.bf16.mxu0 0
    %619 = vmatpush2.bf16.msra.mxu0 0
    %620 = vmatprep.subr.bf16.mxu0 0
    %621 = vmatpush2.bf16.msra.mxu0 0
    %622 = vmatprep.subr.bf16.mxu0 0
    %623 = vmatpush2.bf16.msra.mxu0 0
    %624 = vmatprep.subr.bf16.mxu0 0
    %625 = vmatpush2.bf16.msra.mxu0 0
    %626 = vmatprep.subr.bf16.mxu0 0
    %627 = vmatpush2.bf16.msra.mxu0 0
    %628 = vmatprep.subr.bf16.mxu0 0
    %629 = vmatpush2.bf16.msra.mxu0 0
    %630 = vmatprep.subr.bf16.mxu0 0
    %631 = vmatpush2.bf16.msra.mxu0 0
    %632 = vmatprep.mubr.bf16.mxu0 0
    %633 = vmatmul.mubr.bf16.gmra.mxu0 %v598
    %v634 = vpop.f32.mrf.mxu0
    %v635 = vadd.f32 0.0, %v634
    %v636 = vpop.f32.mrf.mxu0
    %v637 = vpop.f32.mrf.mxu0
    %v638 = vadd.f32 0.0, %v637
    %v639 = vpop.f32.mrf.mxu0
    %640 = vdwg.mxu0
    %v643 = vunpack.c.l.b16 %v570
    %v644 = vunpack.c.l.b16 %v571
    %v645 = vpack.c.b16 %v644, %v643
    %v647 = vsel %vm173, %v645, 0
    %649 = vmatprep.subr.bf16.mxu0 0
    %650 = vmatpush1.bf16.msra.mxu0 0
    %651 = vmatprep.subr.bf16.mxu0 0
    %652 = vmatpush1.bf16.msra.mxu0 0
    %653 = vmatprep.subr.bf16.mxu0 0
    %654 = vmatpush1.bf16.msra.mxu0 0
    %655 = vmatprep.subr.bf16.mxu0 0
    %656 = vmatpush1.bf16.msra.mxu0 0
    %657 = vmatprep.subr.bf16.mxu0 0
    %658 = vmatpush1.bf16.msra.mxu0 0
    %659 = vmatprep.subr.bf16.mxu0 0
    %660 = vmatpush1.bf16.msra.mxu0 0
    %661 = vmatprep.subr.bf16.mxu0 0
    %662 = vmatpush1.bf16.msra.mxu0 0
    %663 = vmatprep.subr.bf16.mxu0 0
    %664 = vmatpush1.bf16.msra.mxu0 %v585
    %665 = vmatprep.subr.bf16.mxu0 0
    %666 = vmatpush2.bf16.msra.mxu0 0
    %667 = vmatprep.subr.bf16.mxu0 0
    %668 = vmatpush2.bf16.msra.mxu0 0
    %669 = vmatprep.subr.bf16.mxu0 0
    %670 = vmatpush2.bf16.msra.mxu0 0
    %671 = vmatprep.subr.bf16.mxu0 0
    %672 = vmatpush2.bf16.msra.mxu0 0
    %673 = vmatprep.subr.bf16.mxu0 0
    %674 = vmatpush2.bf16.msra.mxu0 0
    %675 = vmatprep.subr.bf16.mxu0 0
    %676 = vmatpush2.bf16.msra.mxu0 0
    %677 = vmatprep.subr.bf16.mxu0 0
    %678 = vmatpush2.bf16.msra.mxu0 0
    %679 = vmatprep.subr.bf16.mxu0 0
    %680 = vmatpush2.bf16.msra.mxu0 0
    %681 = vmatprep.mubr.bf16.mxu0 0
    %682 = vmatmul.mubr.bf16.gmra.mxu0 %v647
    %v683 = vpop.f32.mrf.mxu0
    %v684 = vadd.f32 0.0, %v683
    %v685 = vpop.f32.mrf.mxu0
    %v686 = vpop.f32.mrf.mxu0
    %v687 = vadd.f32 0.0, %v686
    %v688 = vpop.f32.mrf.mxu0
    %689 = vdwg.mxu0
    %v692 = vunpack.c.l.b16 %v572
    %v693 = vunpack.c.l.b16 %v573
    %v694 = vpack.c.b16 %v693, %v692
    %v696 = vsel %vm173, %v694, 0
    %698 = vmatprep.subr.bf16.mxu0 0
    %699 = vmatpush1.bf16.msra.mxu0 0
    %700 = vmatprep.subr.bf16.mxu0 0
    %701 = vmatpush1.bf16.msra.mxu0 0
    %702 = vmatprep.subr.bf16.mxu0 0
    %703 = vmatpush1.bf16.msra.mxu0 0
    %704 = vmatprep.subr.bf16.mxu0 0
    %705 = vmatpush1.bf16.msra.mxu0 0
    %706 = vmatprep.subr.bf16.mxu0 0
    %707 = vmatpush1.bf16.msra.mxu0 0
    %708 = vmatprep.subr.bf16.mxu0 0
    %709 = vmatpush1.bf16.msra.mxu0 0
    %710 = vmatprep.subr.bf16.mxu0 0
    %711 = vmatpush1.bf16.msra.mxu0 0
    %712 = vmatprep.subr.bf16.mxu0 0
    %713 = vmatpush1.bf16.msra.mxu0 %v586
    %714 = vmatprep.subr.bf16.mxu0 0
    %715 = vmatpush2.bf16.msra.mxu0 0
    %716 = vmatprep.subr.bf16.mxu0 0
    %717 = vmatpush2.bf16.msra.mxu0 0
    %718 = vmatprep.subr.bf16.mxu0 0
    %719 = vmatpush2.bf16.msra.mxu0 0
    %720 = vmatprep.subr.bf16.mxu0 0
    %721 = vmatpush2.bf16.msra.mxu0 0
    %722 = vmatprep.subr.bf16.mxu0 0
    %723 = vmatpush2.bf16.msra.mxu0 0
    %724 = vmatprep.subr.bf16.mxu0 0
    %725 = vmatpush2.bf16.msra.mxu0 0
    %726 = vmatprep.subr.bf16.mxu0 0
    %727 = vmatpush2.bf16.msra.mxu0 0
    %728 = vmatprep.subr.bf16.mxu0 0
    %729 = vmatpush2.bf16.msra.mxu0 0
    %730 = vmatprep.mubr.bf16.mxu0 0
    %731 = vmatmul.mubr.bf16.gmra.mxu0 %v696
    %v732 = vpop.f32.mrf.mxu0
    %v733 = vadd.f32 0.0, %v732
    %v734 = vpop.f32.mrf.mxu0
    %v735 = vpop.f32.mrf.mxu0
    %v736 = vadd.f32 0.0, %v735
    %v737 = vpop.f32.mrf.mxu0
    %738 = vdwg.mxu0
    %v741 = vunpack.c.l.b16 %v574
    %v742 = vunpack.c.l.b16 %v575
    %v743 = vpack.c.b16 %v742, %v741
    %v745 = vsel %vm173, %v743, 0
    %747 = vmatprep.subr.bf16.mxu0 0
    %748 = vmatpush1.bf16.msra.mxu0 0
    %749 = vmatprep.subr.bf16.mxu0 0
    %750 = vmatpush1.bf16.msra.mxu0 0
    %751 = vmatprep.subr.bf16.mxu0 0
    %752 = vmatpush1.bf16.msra.mxu0 0
    %753 = vmatprep.subr.bf16.mxu0 0
    %754 = vmatpush1.bf16.msra.mxu0 0
    %755 = vmatprep.subr.bf16.mxu0 0
    %756 = vmatpush1.bf16.msra.mxu0 0
    %757 = vmatprep.subr.bf16.mxu0 0
    %758 = vmatpush1.bf16.msra.mxu0 0
    %759 = vmatprep.subr.bf16.mxu0 0
    %760 = vmatpush1.bf16.msra.mxu0 0
    %761 = vmatprep.subr.bf16.mxu0 0
    %762 = vmatpush1.bf16.msra.mxu0 %v587
    %763 = vmatprep.subr.bf16.mxu0 0
    %764 = vmatpush2.bf16.msra.mxu0 0
    %765 = vmatprep.subr.bf16.mxu0 0
    %766 = vmatpush2.bf16.msra.mxu0 0
    %767 = vmatprep.subr.bf16.mxu0 0
    %768 = vmatpush2.bf16.msra.mxu0 0
    %769 = vmatprep.subr.bf16.mxu0 0
    %770 = vmatpush2.bf16.msra.mxu0 0
    %771 = vmatprep.subr.bf16.mxu0 0
    %772 = vmatpush2.bf16.msra.mxu0 0
    %773 = vmatprep.subr.bf16.mxu0 0
    %774 = vmatpush2.bf16.msra.mxu0 0
    %775 = vmatprep.subr.bf16.mxu0 0
    %776 = vmatpush2.bf16.msra.mxu0 0
    %777 = vmatprep.subr.bf16.mxu0 0
    %778 = vmatpush2.bf16.msra.mxu0 0
    %779 = vmatprep.mubr.bf16.mxu0 0
    %780 = vmatmul.mubr.bf16.gmra.mxu0 %v745
    %v781 = vpop.f32.mrf.mxu0
    %v782 = vadd.f32 0.0, %v781
    %v783 = vpop.f32.mrf.mxu0
    %v784 = vpop.f32.mrf.mxu0
    %v785 = vadd.f32 0.0, %v784
    %v786 = vpop.f32.mrf.mxu0
    %787 = vdwg.mxu0
    %v790 = vunpack.c.l.b16 %v576
    %v791 = vunpack.c.l.b16 %v577
    %v792 = vpack.c.b16 %v791, %v790
    %v794 = vsel %vm173, %v792, 0
    %796 = vmatprep.subr.bf16.mxu0 0
    %797 = vmatpush1.bf16.msra.mxu0 0
    %798 = vmatprep.subr.bf16.mxu0 0
    %799 = vmatpush1.bf16.msra.mxu0 0
    %800 = vmatprep.subr.bf16.mxu0 0
    %801 = vmatpush1.bf16.msra.mxu0 0
    %802 = vmatprep.subr.bf16.mxu0 0
    %803 = vmatpush1.bf16.msra.mxu0 0
    %804 = vmatprep.subr.bf16.mxu0 0
    %805 = vmatpush1.bf16.msra.mxu0 0
    %806 = vmatprep.subr.bf16.mxu0 0
    %807 = vmatpush1.bf16.msra.mxu0 0
    %808 = vmatprep.subr.bf16.mxu0 0
    %809 = vmatpush1.bf16.msra.mxu0 0
    %810 = vmatprep.subr.bf16.mxu0 0
    %811 = vmatpush1.bf16.msra.mxu0 %v588
    %812 = vmatprep.subr.bf16.mxu0 0
    %813 = vmatpush2.bf16.msra.mxu0 0
    %814 = vmatprep.subr.bf16.mxu0 0
    %815 = vmatpush2.bf16.msra.mxu0 0
    %816 = vmatprep.subr.bf16.mxu0 0
    %817 = vmatpush2.bf16.msra.mxu0 0
    %818 = vmatprep.subr.bf16.mxu0 0
    %819 = vmatpush2.bf16.msra.mxu0 0
    %820 = vmatprep.subr.bf16.mxu0 0
    %821 = vmatpush2.bf16.msra.mxu0 0
    %822 = vmatprep.subr.bf16.mxu0 0
    %823 = vmatpush2.bf16.msra.mxu0 0
    %824 = vmatprep.subr.bf16.mxu0 0
    %825 = vmatpush2.bf16.msra.mxu0 0
    %826 = vmatprep.subr.bf16.mxu0 0
    %827 = vmatpush2.bf16.msra.mxu0 0
    %828 = vmatprep.mubr.bf16.mxu0 0
    %829 = vmatmul.mubr.bf16.gmra.mxu0 %v794
    %v830 = vpop.f32.mrf.mxu0
    %v831 = vadd.f32 0.0, %v830
    %v832 = vpop.f32.mrf.mxu0
    %v833 = vpop.f32.mrf.mxu0
    %v834 = vadd.f32 0.0, %v833
    %v835 = vpop.f32.mrf.mxu0
    %836 = vdwg.mxu0
    %v839 = vunpack.c.l.b16 %v578
    %v840 = vunpack.c.l.b16 %v579
    %v841 = vpack.c.b16 %v840, %v839
    %v843 = vsel %vm173, %v841, 0
    %845 = vmatprep.subr.bf16.mxu0 0
    %846 = vmatpush1.bf16.msra.mxu0 0
    %847 = vmatprep.subr.bf16.mxu0 0
    %848 = vmatpush1.bf16.msra.mxu0 0
    %849 = vmatprep.subr.bf16.mxu0 0
    %850 = vmatpush1.bf16.msra.mxu0 0
    %851 = vmatprep.subr.bf16.mxu0 0
    %852 = vmatpush1.bf16.msra.mxu0 0
    %853 = vmatprep.subr.bf16.mxu0 0
    %854 = vmatpush1.bf16.msra.mxu0 0
    %855 = vmatprep.subr.bf16.mxu0 0
    %856 = vmatpush1.bf16.msra.mxu0 0
    %857 = vmatprep.subr.bf16.mxu0 0
    %858 = vmatpush1.bf16.msra.mxu0 0
    %859 = vmatprep.subr.bf16.mxu0 0
    %860 = vmatpush1.bf16.msra.mxu0 %v589
    %861 = vmatprep.subr.bf16.mxu0 0
    %862 = vmatpush2.bf16.msra.mxu0 0
    %863 = vmatprep.subr.bf16.mxu0 0
    %864 = vmatpush2.bf16.msra.mxu0 0
    %865 = vmatprep.subr.bf16.mxu0 0
    %866 = vmatpush2.bf16.msra.mxu0 0
    %867 = vmatprep.subr.bf16.mxu0 0
    %868 = vmatpush2.bf16.msra.mxu0 0
    %869 = vmatprep.subr.bf16.mxu0 0
    %870 = vmatpush2.bf16.msra.mxu0 0
    %871 = vmatprep.subr.bf16.mxu0 0
    %872 = vmatpush2.bf16.msra.mxu0 0
    %873 = vmatprep.subr.bf16.mxu0 0
    %874 = vmatpush2.bf16.msra.mxu0 0
    %875 = vmatprep.subr.bf16.mxu0 0
    %876 = vmatpush2.bf16.msra.mxu0 0
    %877 = vmatprep.mubr.bf16.mxu0 0
    %878 = vmatmul.mubr.bf16.gmra.mxu0 %v843
    %v879 = vpop.f32.mrf.mxu0
    %v880 = vadd.f32 0.0, %v879
    %v881 = vpop.f32.mrf.mxu0
    %v882 = vpop.f32.mrf.mxu0
    %v883 = vadd.f32 0.0, %v882
    %v884 = vpop.f32.mrf.mxu0
    %885 = vdwg.mxu0
    %v888 = vunpack.c.l.b16 %v580
    %v889 = vunpack.c.l.b16 %v581
    %v890 = vpack.c.b16 %v889, %v888
    %v892 = vsel %vm173, %v890, 0
    %894 = vmatprep.subr.bf16.mxu0 0
    %895 = vmatpush1.bf16.msra.mxu0 0
    %896 = vmatprep.subr.bf16.mxu0 0
    %897 = vmatpush1.bf16.msra.mxu0 0
    %898 = vmatprep.subr.bf16.mxu0 0
    %899 = vmatpush1.bf16.msra.mxu0 0
    %900 = vmatprep.subr.bf16.mxu0 0
    %901 = vmatpush1.bf16.msra.mxu0 0
    %902 = vmatprep.subr.bf16.mxu0 0
    %903 = vmatpush1.bf16.msra.mxu0 0
    %904 = vmatprep.subr.bf16.mxu0 0
    %905 = vmatpush1.bf16.msra.mxu0 0
    %906 = vmatprep.subr.bf16.mxu0 0
    %907 = vmatpush1.bf16.msra.mxu0 0
    %908 = vmatprep.subr.bf16.mxu0 0
    %909 = vmatpush1.bf16.msra.mxu0 %v590
    %910 = vmatprep.subr.bf16.mxu0 0
    %911 = vmatpush2.bf16.msra.mxu0 0
    %912 = vmatprep.subr.bf16.mxu0 0
    %913 = vmatpush2.bf16.msra.mxu0 0
    %914 = vmatprep.subr.bf16.mxu0 0
    %915 = vmatpush2.bf16.msra.mxu0 0
    %916 = vmatprep.subr.bf16.mxu0 0
    %917 = vmatpush2.bf16.msra.mxu0 0
    %918 = vmatprep.subr.bf16.mxu0 0
    %919 = vmatpush2.bf16.msra.mxu0 0
    %920 = vmatprep.subr.bf16.mxu0 0
    %921 = vmatpush2.bf16.msra.mxu0 0
    %922 = vmatprep.subr.bf16.mxu0 0
    %923 = vmatpush2.bf16.msra.mxu0 0
    %924 = vmatprep.subr.bf16.mxu0 0
    %925 = vmatpush2.bf16.msra.mxu0 0
    %926 = vmatprep.mubr.bf16.mxu0 0
    %927 = vmatmul.mubr.bf16.gmra.mxu0 %v892
    %v928 = vpop.f32.mrf.mxu0
    %v929 = vadd.f32 0.0, %v928
    %v930 = vpop.f32.mrf.mxu0
    %v931 = vpop.f32.mrf.mxu0
    %v932 = vadd.f32 0.0, %v931
    %v933 = vpop.f32.mrf.mxu0
    %934 = vdwg.mxu0
    %v937 = vunpack.c.l.b16 %v582
    %v938 = vunpack.c.l.b16 %v583
    %v939 = vpack.c.b16 %v938, %v937
    %v941 = vsel %vm173, %v939, 0
    %943 = vmatprep.subr.bf16.mxu0 0
    %944 = vmatpush1.bf16.msra.mxu0 0
    %945 = vmatprep.subr.bf16.mxu0 0
    %946 = vmatpush1.bf16.msra.mxu0 0
    %947 = vmatprep.subr.bf16.mxu0 0
    %948 = vmatpush1.bf16.msra.mxu0 0
    %949 = vmatprep.subr.bf16.mxu0 0
    %950 = vmatpush1.bf16.msra.mxu0 0
    %951 = vmatprep.subr.bf16.mxu0 0
    %952 = vmatpush1.bf16.msra.mxu0 0
    %953 = vmatprep.subr.bf16.mxu0 0
    %954 = vmatpush1.bf16.msra.mxu0 0
    %955 = vmatprep.subr.bf16.mxu0 0
    %956 = vmatpush1.bf16.msra.mxu0 0
    %957 = vmatprep.subr.bf16.mxu0 0
    %958 = vmatpush1.bf16.msra.mxu0 %v591
    %959 = vmatprep.subr.bf16.mxu0 0
    %960 = vmatpush2.bf16.msra.mxu0 0
    %961 = vmatprep.subr.bf16.mxu0 0
    %962 = vmatpush2.bf16.msra.mxu0 0
    %963 = vmatprep.subr.bf16.mxu0 0
    %964 = vmatpush2.bf16.msra.mxu0 0
    %965 = vmatprep.subr.bf16.mxu0 0
    %966 = vmatpush2.bf16.msra.mxu0 0
    %967 = vmatprep.subr.bf16.mxu0 0
    %968 = vmatpush2.bf16.msra.mxu0 0
    %969 = vmatprep.subr.bf16.mxu0 0
    %970 = vmatpush2.bf16.msra.mxu0 0
    %971 = vmatprep.subr.bf16.mxu0 0
    %972 = vmatpush2.bf16.msra.mxu0 0
    %973 = vmatprep.subr.bf16.mxu0 0
    %974 = vmatpush2.bf16.msra.mxu0 0
    %975 = vmatprep.mubr.bf16.mxu0 0
    %976 = vmatmul.mubr.bf16.gmra.mxu0 %v941
    %v977 = vpop.f32.mrf.mxu0
    %v978 = vadd.f32 0.0, %v977
    %v979 = vpop.f32.mrf.mxu0
    %v980 = vpop.f32.mrf.mxu0
    %v981 = vadd.f32 0.0, %v980
    %v982 = vpop.f32.mrf.mxu0
    %983 = vdwg.mxu0
    %vm984 = vcmp.lt.f32.partialorder %v635, 0.5
    %vm985 = vcmp.lt.f32.partialorder %v638, 0.5
    %vm986 = vcmp.lt.f32.partialorder %v684, 0.5
    %vm987 = vcmp.lt.f32.partialorder %v687, 0.5
    %vm988 = vcmp.lt.f32.partialorder %v733, 0.5
    %vm989 = vcmp.lt.f32.partialorder %v736, 0.5
    %vm990 = vcmp.lt.f32.partialorder %v782, 0.5
    %vm991 = vcmp.lt.f32.partialorder %v785, 0.5
    %vm992 = vcmp.lt.f32.partialorder %v831, 0.5
    %vm993 = vcmp.lt.f32.partialorder %v834, 0.5
    %vm994 = vcmp.lt.f32.partialorder %v880, 0.5
    %vm995 = vcmp.lt.f32.partialorder %v883, 0.5
    %vm996 = vcmp.lt.f32.partialorder %v929, 0.5
    %vm997 = vcmp.lt.f32.partialorder %v932, 0.5
    %vm998 = vcmp.lt.f32.partialorder %v978, 0.5
    %vm999 = vcmp.lt.f32.partialorder %v981, 0.5
    %v1000 = vsel %vm984, 1.0, 0.0
    %v1001 = vsel %vm985, 1.0, 0.0
    %v1002 = vsel %vm986, 1.0, 0.0
    %v1003 = vsel %vm987, 1.0, 0.0
    %v1004 = vsel %vm988, 1.0, 0.0
    %v1005 = vsel %vm989, 1.0, 0.0
    %v1006 = vsel %vm990, 1.0, 0.0
    %v1007 = vsel %vm991, 1.0, 0.0
    %v1008 = vsel %vm992, 1.0, 0.0
    %v1009 = vsel %vm993, 1.0, 0.0
    %v1010 = vsel %vm994, 1.0, 0.0
    %v1011 = vsel %vm995, 1.0, 0.0
    %v1012 = vsel %vm996, 1.0, 0.0
    %v1013 = vsel %vm997, 1.0, 0.0
    %v1014 = vsel %vm998, 1.0, 0.0
    %v1015 = vsel %vm999, 1.0, 0.0
    %v1016 = vpack.c.bf16 %v1001, %v1000
    %v1017 = vpack.c.bf16 %v1003, %v1002
    %v1018 = vpack.c.bf16 %v1005, %v1004
    %v1019 = vpack.c.bf16 %v1007, %v1006
    %v1020 = vpack.c.bf16 %v1009, %v1008
    %v1021 = vpack.c.bf16 %v1011, %v1010
    %v1022 = vpack.c.bf16 %v1013, %v1012
    %v1023 = vpack.c.bf16 %v1015, %v1014
    %v1032 = vunpack.c.l.b16 %v1016
    %v1033 = vunpack.c.h.b16 %v1016
    %v1034 = vunpack.c.l.b16 %v1017
    %v1035 = vunpack.c.h.b16 %v1017
    %v1036 = vunpack.c.l.b16 %v1018
    %v1037 = vunpack.c.h.b16 %v1018
    %v1038 = vunpack.c.l.b16 %v1019
    %v1039 = vunpack.c.h.b16 %v1019
    %v1040 = vunpack.c.l.b16 %v1020
    %v1041 = vunpack.c.h.b16 %v1020
    %v1042 = vunpack.c.l.b16 %v1021
    %v1043 = vunpack.c.h.b16 %v1021
    %v1044 = vunpack.c.l.b16 %v1022
    %v1045 = vunpack.c.h.b16 %v1022
    %v1046 = vunpack.c.l.b16 %v1023
    %v1047 = vunpack.c.h.b16 %v1023
    %v1048 = vpack.c.b16 %v1032, %v1032
    %v1049 = vpack.c.b16 %v1033, %v1033
    %v1050 = vpack.c.b16 %v1034, %v1034
    %v1051 = vpack.c.b16 %v1035, %v1035
    %v1052 = vpack.c.b16 %v1036, %v1036
    %v1053 = vpack.c.b16 %v1037, %v1037
    %v1054 = vpack.c.b16 %v1038, %v1038
    %v1055 = vpack.c.b16 %v1039, %v1039
    %v1056 = vpack.c.b16 %v1040, %v1040
    %v1057 = vpack.c.b16 %v1041, %v1041
    %v1058 = vpack.c.b16 %v1042, %v1042
    %v1059 = vpack.c.b16 %v1043, %v1043
    %v1060 = vpack.c.b16 %v1044, %v1044
    %v1061 = vpack.c.b16 %v1045, %v1045
    %v1062 = vpack.c.b16 %v1046, %v1046
    %v1063 = vpack.c.b16 %v1047, %v1047
    %vm1080 = vcmask 125952
    %1081 = vst.msk [vmem:[#allocation10] sm:$0xf] %vm1080, %v1048
    %1082 = vst.msk [vmem:[#allocation10 + $0x4] sm:$0xf] %vm1080, %v1049
    %1083 = vst.msk [vmem:[#allocation10 + $0x8] sm:$0xf] %vm1080, %v1050
    %1084 = vst.msk [vmem:[#allocation10 + $0xc] sm:$0xf] %vm1080, %v1051
    %1085 = vst.msk [vmem:[#allocation10 + $0x10] sm:$0xf] %vm1080, %v1052
    %1086 = vst.msk [vmem:[#allocation10 + $0x14] sm:$0xf] %vm1080, %v1053
    %1087 = vst.msk [vmem:[#allocation10 + $0x18] sm:$0xf] %vm1080, %v1054
    %1088 = vst.msk [vmem:[#allocation10 + $0x1c] sm:$0xf] %vm1080, %v1055
    %1089 = vst.msk [vmem:[#allocation10 + $0x20] sm:$0xf] %vm1080, %v1056
    %1090 = vst.msk [vmem:[#allocation10 + $0x24] sm:$0xf] %vm1080, %v1057
    %1091 = vst.msk [vmem:[#allocation10 + $0x28] sm:$0xf] %vm1080, %v1058
    %1092 = vst.msk [vmem:[#allocation10 + $0x2c] sm:$0xf] %vm1080, %v1059
    %1093 = vst.msk [vmem:[#allocation10 + $0x30] sm:$0xf] %vm1080, %v1060
    %1094 = vst.msk [vmem:[#allocation10 + $0x34] sm:$0xf] %vm1080, %v1061
    %1095 = vst.msk [vmem:[#allocation10 + $0x38] sm:$0xf] %vm1080, %v1062
    %1096 = vst.msk [vmem:[#allocation10 + $0x3c] sm:$0xf] %vm1080, %v1063
    %v1097 = vsel %vm173, %v1000, 0.0
    %v1098 = vsel %vm173, %v1001, 0.0
    %v1099 = vadd.f32 %v1097, %v1098
    %v1100 = vsel %vm173, %v1002, 0.0
    %v1101 = vadd.f32 %v1099, %v1100
    %v1102 = vsel %vm173, %v1003, 0.0
    %v1103 = vadd.f32 %v1101, %v1102
    %v1104 = vsel %vm173, %v1004, 0.0
    %v1105 = vadd.f32 %v1103, %v1104
    %v1106 = vsel %vm173, %v1005, 0.0
    %v1107 = vadd.f32 %v1105, %v1106
    %v1108 = vsel %vm173, %v1006, 0.0
    %v1109 = vadd.f32 %v1107, %v1108
    %v1110 = vsel %vm173, %v1007, 0.0
    %v1111 = vadd.f32 %v1109, %v1110
    %v1112 = vsel %vm173, %v1008, 0.0
    %v1113 = vadd.f32 %v1111, %v1112
    %v1114 = vsel %vm173, %v1009, 0.0
    %v1115 = vadd.f32 %v1113, %v1114
    %v1116 = vsel %vm173, %v1010, 0.0
    %v1117 = vadd.f32 %v1115, %v1116
    %v1118 = vsel %vm173, %v1011, 0.0
    %v1119 = vadd.f32 %v1117, %v1118
    %v1120 = vsel %vm173, %v1012, 0.0
    %v1121 = vadd.f32 %v1119, %v1120
    %v1122 = vsel %vm173, %v1013, 0.0
    %v1123 = vadd.f32 %v1121, %v1122
    %v1124 = vsel %vm173, %v1014, 0.0
    %v1125 = vadd.f32 %v1123, %v1124
    %v1126 = vsel %vm173, %v1015, 0.0
    %v1127 = vadd.f32 %v1125, %v1126
    %1128 = vadd.xlane.f32.xlu0 %v1127
    %v1129 = vpop.xlane.xlu0 %1128
    %v1130 = vrot.slane %v1129, 4
    %v1131 = vadd.f32 %v1129, %v1130
    %v1132 = vrot.slane %v1131, 2
    %v1133 = vadd.f32 %v1131, %v1132
    %v1134 = vrot.slane %v1133, 1
    %v1135 = vadd.f32 %v1133, %v1134
    %s1136 = vtos %v1135
    %v1137 = vstv %s1136
    %vm1138 = vcmask 0
    %1139 = vst.msk [vmem:[#allocation11] sm:$0x1] %vm1138, %v1137
    // Predicated region
    $region34: #{tpu_custom_call.1} parent=1 // pred_check
      _
    $region35: #{tpu_custom_call.1} parent=1 // pred_check_branch
      %1141 = sbr.rel (0) target = $region37
    $region36: #{tpu_custom_call.1} parent=1 // pred_region
      %s1143 = ssub.s32 1024, 1024
      %1144 = vsyncadd [#allocation4], %s1143
      %s1145 = sshll.u32 [#allocation10], 4
      %s1146 = int_to_ptr.vmem [resolvable:$true] %s1145
      %1151 = dma.vmem_to_hbm [thread:$0]  %s1146, 1024, %s4, [#allocation4], 64, 64, 4
    $region37: #{tpu_custom_call.1} parent=1 // pred_fallthru
      _
    // Predicated region
    $region38: #{tpu_custom_call.1} parent=1 // pred_check
      _
    $region39: #{tpu_custom_call.1} parent=1 // pred_check_branch
      %1153 = sbr.rel (0) target = $region41
    $region40: #{tpu_custom_call.1} parent=1 // pred_region
      %s1155 = ssub.s32 16, 16
      %1156 = vsyncadd [#allocation12], %s1155
      %s1158 = sshll.u32 [#allocation11], 4
      %s1159 = int_to_ptr.vmem [resolvable:$true] %s1158
      %1161 = dma.vmem_to_hbm [thread:$0]  %s1159, 16, %s5, [#allocation12]
    $region41: #{tpu_custom_call.1} parent=1 // pred_fallthru
      _
    // Predicated region
    $region42: #{tpu_custom_call.1} parent=1 // pred_check
      _
    $region43: #{tpu_custom_call.1} parent=1 // pred_check_branch
      %1163 = sbr.rel (0) target = $region45
    $region44: #{tpu_custom_call.1} parent=1 // pred_region
      %1164 = dma.done [#allocation4], 1024
    $region45: #{tpu_custom_call.1} parent=1 // pred_fallthru
      _
    // Predicated region
    $region46: #{tpu_custom_call.1} parent=1 // pred_check
      _
    $region47: #{tpu_custom_call.1} parent=1 // pred_check_branch
      %1166 = sbr.rel (0) target = $region49
    $region48: #{tpu_custom_call.1} parent=1 // pred_region
      %1167 = dma.done [#allocation12], 16
    $region49: #{tpu_custom_call.1} parent=1 // pred_fallthru
      _
    %1168 = vsyncpa [#allocation3], 1
    %1169 = vsyncpa [#allocation6], 1
    %1170 = vsyncpa [#allocation9], 1
    %1171 = vsyncpa [#allocation4], 1
    %1172 = vsyncpa [#allocation12], 1

</llo_original>
